<compile_context>
chip_gen: v5e
topology: v5e:2x2
jax: 0.10.0
libtpu: 0.0.40
codegen_flags: <defaults>
</compile_context>

<pallas_src>
import math
import functools

import jax
import jax.numpy as jnp
from jax.experimental import pallas as pl
from jax.experimental.pallas import tpu as pltpu


def _gdrop_kernel(rnd_ref, x_ref, o_ref, *, log_base, tile_rows, rnd_full):
    """Broadcast-multiply hot path.

    rnd_ref: (rows_ceil, 1) resident block (rnd_full=True) or (tile_rows, 1)
             streamed block. x_ref/o_ref: (tile_rows, tile_cols).
    """
    if rnd_full:
        i = pl.program_id(0)
        start = pl.multiple_of(i * tile_rows, tile_rows)  # tile_rows is a multiple of 8
        r = rnd_ref[pl.ds(start, tile_rows), :]
    else:
        r = rnd_ref[...]
    r = r.astype(jnp.float32)
    if log_base is not None:
        # mode == 'mul': multiplier = (1 + strength) ** z == exp(z * ln(1 + strength)).
        # exp runs on the EUP (separate VLIW slot) over only (tile_rows, 1) elements.
        r = jnp.exp(r * log_base)
    # Multiply in x's dtype (matches PyTorch's rnd.type(x.data.type()); bf16-native
    # on v6e/v7x, so the mem-bound main loop carries no extra f32 vreg traffic).
    o_ref[...] = x_ref[...] * r.astype(o_ref.dtype)


def _make_rnd(key, mode, strength, normalize, n, c):
    """Per-(n, c) random factor, shape (n, c) float32.

    Returns (rnd_or_z, log_base). If log_base is not None the kernel applies
    exp(z * log_base) (i.e. (1 + strength) ** z) to produce the multiplier.
    """
    log_base = None
    if mode == 'drop':
        p = 1.0 - strength
        assert p > 0.0, "'drop' mode requires strength < 1 (keep-probability would be 0)"
        rnd = jax.random.bernoulli(key, p=p, shape=(n, c)).astype(jnp.float32) / p
    elif mode == 'mul':
        rnd = jax.random.normal(key, (n, c), dtype=jnp.float32)  # z; exponentiated in-kernel
        log_base = math.log(1.0 + strength)
    else:  # 'prop'
        coef = strength * (c ** 0.5)
        rnd = jax.random.normal(key, (n, c), dtype=jnp.float32) * coef + 1.0
    if normalize:
        # Materialize the actual multiplier before normalizing (Frobenius norm).
        if log_base is not None:
            rnd = jnp.exp(rnd * log_base)
            log_base = None
        rnd = rnd / jnp.linalg.norm(rnd)
    return rnd, log_base


def generalized_drop_out(x, key, *, mode='mul', strength=0.4, axes=(0, 1),
                         normalize=False, deterministic=False,
                         target_block_bytes=2 * 1024 * 1024,
                         max_block_cols=8192):
    mode = mode.lower()
    assert mode in ('mul', 'drop', 'prop'), 'invalid GProplayer mode %s' % mode
    axes = [axes] if isinstance(axes, int) else list(axes)
    if deterministic or not strength:
        return x
    # TODO(synk): only the module's default axes=(0, 1) broadcast pattern is implemented.
    assert axes == [0, 1], "kernel implements the default axes=(0, 1) case"
    assert x.ndim >= 2

    n, c = x.shape[0], x.shape[1]
    spatial = int(math.prod(x.shape[2:]))  # == 1 for 2-D inputs

    rnd, log_base = _make_rnd(key, mode, strength, normalize, n, c)

    rows = n * c
    x2d = x.reshape(rows, spatial)  # free view-style reshape, no extra HBM pass
    itemsize = jnp.dtype(x.dtype).itemsize

    # ---- column tiling ------------------------------------------------------
    # Full-extent last dim (escape hatch for the (8,128) rule) when spatial is
    # modest; otherwise a 128-multiple column tile so block bytes stay bounded.
    if spatial <= max_block_cols:
        tile_cols = spatial
    else:
        tile_cols = max_block_cols  # multiple of 128; ragged tail masked by Pallas
    grid_cols = pl.cdiv(spatial, tile_cols)

    # ---- row tiling: aim for ~target_block_bytes (~2 MiB) per block ---------
    bytes_per_row = max(tile_cols * itemsize, 1)
    rows_per_block = max(target_block_bytes // bytes_per_row, 8)
    tile_rows = min(rows_per_block, pl.cdiv(rows, 8) * 8)
    tile_rows = max((tile_rows // 8) * 8, 8)
    grid_rows = pl.cdiv(rows, tile_rows)

    # Prefer a few grid steps (v7x has 2 TensorCores sharding 'parallel' axes)
    # as long as each block stays >= ~1 MiB so per-step overhead is negligible.
    while (grid_rows * grid_cols < 4 and tile_rows > 8
           and tile_rows * tile_cols * itemsize >= 2 * 1024 * 1024):
        tile_rows = max(((tile_rows // 2) // 8) * 8, 8)
        grid_rows = pl.cdiv(rows, tile_rows)

    rows_ceil = grid_rows * tile_rows

    # Random factors: tiny (rows * 4 bytes). Padding it (NOT x) is negligible.
    rnd2d = rnd.reshape(rows, 1)
    if rows_ceil != rows:
        rnd2d = jnp.pad(rnd2d, ((0, rows_ceil - rows), (0, 0)))

    # Keep the whole rnd vector VMEM-resident (one DMA, constant index map) unless
    # it is huge; VMEM cost of an (R, 1) f32 block is ~R*512 bytes (lane-padded).
    rnd_full = rows_ceil * 512 <= 2 * 1024 * 1024
    if rnd_full:
        rnd_spec = pl.BlockSpec((rows_ceil, 1), lambda i, j: (0, 0))
    else:
        rnd_spec = pl.BlockSpec((tile_rows, 1), lambda i, j: (i, 0))

    kernel = functools.partial(_gdrop_kernel, log_base=log_base,
                               tile_rows=tile_rows, rnd_full=rnd_full)

    # NOTE: input_output_aliases={1: 0} could alias x into the output (saves an
    # HBM buffer) but would invalidate the caller's x; left off by default.
    out2d = pl.pallas_call(
        kernel,
        out_shape=jax.ShapeDtypeStruct((rows, spatial), x.dtype),
        grid=(grid_rows, grid_cols),
        in_specs=[
            rnd_spec,                                               # per-row random factor
            pl.BlockSpec((tile_rows, tile_cols), lambda i, j: (i, j)),  # data tile
        ],
        out_specs=pl.BlockSpec((tile_rows, tile_cols), lambda i, j: (i, j)),
        compiler_params=pltpu.CompilerParams(
            dimension_semantics=("parallel", "parallel")),
    )(rnd2d, x2d)

    return out2d.reshape(x.shape)


if __name__ == "__main__":
    key = jax.random.PRNGKey(0)
    kx, k1, k2, k3 = jax.random.split(key, 4)

    # NCHW input, consistent with PyTorch conv-style activations.
    x = jax.random.normal(kx, (2, 4, 16, 16), dtype=jnp.float32)

    # mode='mul' (module default)
    out = jax.block_until_ready(generalized_drop_out(x, k1, mode='mul', strength=0.4))
    z, lb = _make_rnd(k1, 'mul', 0.4, False, 2, 4)
    ref = x * jnp.exp(z * lb).reshape(2, 4, 1, 1)
    assert out.shape == x.shape and out.dtype == x.dtype
    assert jnp.allclose(out, ref, atol=1e-5, rtol=1e-5), "mul mismatch vs reference"

    # mode='drop'
    out_d = jax.block_until_ready(generalized_drop_out(x, k2, mode='drop', strength=0.4))
    rnd_d, _ = _make_rnd(k2, 'drop', 0.4, False, 2, 4)
    assert jnp.allclose(out_d, x * rnd_d.reshape(2, 4, 1, 1), atol=1e-5, rtol=1e-5), \
        "drop mismatch vs reference"

    # Ragged shapes (rows=6 not a multiple of 8, spatial=35 not a multiple of 128):
    # exercises Pallas boundary masking with no explicit padding/slicing of x.
    xr = jax.random.normal(k3, (2, 3, 5, 7), dtype=jnp.float32)
    out_r = jax.block_until_ready(generalized_drop_out(xr, k3, mode='prop', strength=0.4))
    rnd_r, _ = _make_rnd(k3, 'prop', 0.4, False, 2, 3)
    assert jnp.allclose(out_r, xr * rnd_r.reshape(2, 3, 1, 1), atol=1e-5, rtol=1e-5), \
        "prop/ragged mismatch vs reference"

    # deterministic path returns x unchanged (module's early-return branch)
    assert jnp.array_equal(generalized_drop_out(xr, k3, deterministic=True), xr)

    print("KERNEL_OK")
</pallas_src>

<mosaic_0001>
module attributes {stable_mosaic.version = 11 : i64} {
  func.func @_gdrop_kernel(%arg0: i32, %arg1: i32, %arg2: memref<8x1xf32, #tpu.memory_space<vmem>>, %arg3: memref<8x256xf32, #tpu.memory_space<vmem>>, %arg4: memref<8x256xf32, #tpu.memory_space<vmem>>) attributes {dimension_semantics = [#tpu.dimension_semantics<parallel>, #tpu.dimension_semantics<parallel>], iteration_bounds = array<i64: 1, 1>, scalar_prefetch = 0 : i64, scratch_operands = 0 : i64, tpu.core_type = #tpu.core_type<tc>, window_params = [{pipeline_mode = #tpu.pipeline_mode<synchronous>, transform_indices = @transform_0, window_bounds = array<i64: 8, 1>}, {transform_indices = @transform_1, window_bounds = array<i64: 8, 256>}, {transform_indices = @transform_2, window_bounds = array<i64: 8, 256>}]} {
    %c8_i32 = arith.constant 8 : i32
    %0 = arith.muli %arg0, %c8_i32 : i32
    %1 = tpu.assume_multiple %0, 8 : i32
    %2 = arith.index_cast %1 : i32 to index
    %c0 = arith.constant 0 : index
    %3 = vector.load %arg2[%2, %c0] : memref<8x1xf32, #tpu.memory_space<vmem>>, vector<8x1xf32>
    %cst = arith.constant 0.336472243 : f32
    %4 = vector.broadcast %cst : f32 to vector<8x1xf32>
    %5 = arith.mulf %3, %4 : vector<8x1xf32>
    %6 = math.exp %5 : vector<8x1xf32>
    %c0_0 = arith.constant 0 : index
    %c0_1 = arith.constant 0 : index
    %7 = vector.load %arg3[%c0_0, %c0_1] : memref<8x256xf32, #tpu.memory_space<vmem>>, vector<8x256xf32>
    %8 = vector.broadcast %6 : vector<8x1xf32> to vector<8x256xf32>
    %9 = arith.mulf %7, %8 : vector<8x256xf32>
    %c0_2 = arith.constant 0 : index
    %c0_3 = arith.constant 0 : index
    %10 = vector.load %arg4[%c0_2, %c0_3] : memref<8x256xf32, #tpu.memory_space<vmem>>, vector<8x256xf32>
    tpu.vector_store %arg4[%c0_2, %c0_3], %9 {strides = array<i32>} : memref<8x256xf32, #tpu.memory_space<vmem>>, vector<8x256xf32>,
    return
  }
  func.func @transform_0(%arg0: i32, %arg1: i32) -> (i32, i32) {
    %c0_i32 = arith.constant 0 : i32
    %c0_i32_0 = arith.constant 0 : i32
    %c0_i32_1 = arith.constant 0 : i32
    return %c0_i32, %c0_i32_0 : i32, i32
  }
  func.func @transform_1(%arg0: i32, %arg1: i32) -> (i32, i32) {
    %c0_i32 = arith.constant 0 : i32
    return %arg0, %arg1 : i32, i32
  }
  func.func @transform_2(%arg0: i32, %arg1: i32) -> (i32, i32) {
    %c0_i32 = arith.constant 0 : i32
    return %arg0, %arg1 : i32, i32
  }
}

</mosaic_0001>

<llo_original>
// kernel: tpu_custom_call.1
$region0: #{tpu_custom_call.1}
  #allocation0 [shape = 'u32[]', space=smem, size = 0x4, offset = 0x4, fixed_abs, tag = 'smem constant byte address 0x4 - core index']
  #allocation1 [shape = 'u32[72,128]{1,0:T(1,128)}', space=vmem, size = 0x9000, scoped, tag = 'internal scratch']
  %s0 = inlined_call_operand.vmem [shape: f32[8,1], index: 0, kind: input, shape index: {}]
  %s1 = inlined_call_operand.hbm [shape: f32[8,256], index: 1, kind: input, shape index: {}]
  %s2 = inlined_call_operand.hbm [shape: f32[8,256], index: 2, kind: output, shape index: {}]
  %s3 = sld [smem:[#allocation0]]
  $region22: #{tpu_custom_call.1} parent=0
    _
  %s5 = ssub.s32 1, %s3
  %s6 = scalar_select 0, %s5, %s3
  $region1: #{tpu_custom_call.1} parent=0
    #allocation2 [shape = 'u8[8192]{0}', space=vmem, size = 0x2000, scoped, tag = 'input window, operand 1, single buffered']
    #allocation3 [shape = 's32[1]{0}', space=sflag, size = 0x4, scoped, tag = 'scoped memory for tpu_custom_call.1']
    #allocation4 [shape = 's32[1]{0}', space=sflag, size = 0x4, scoped, tag = 'scoped memory for tpu_custom_call.1']
    #allocation5 [shape = 'u8[8192]{0}', space=vmem, size = 0x2000, scoped, tag = 'output window, operand 0, single buffered']
    %7 = vsyncpa [#allocation3], 0
    %8 = vsyncpa [#allocation4], 0
    // Predicated region
    $region2: #{tpu_custom_call.1} parent=1 // pred_check
      _
    $region3: #{tpu_custom_call.1} parent=1 // pred_check_branch
      %10 = sbr.rel (0) target = $region5
    $region4: #{tpu_custom_call.1} parent=1 // pred_region
      _
    $region5: #{tpu_custom_call.1} parent=1 // pred_fallthru
      _
    // Predicated region
    $region6: #{tpu_custom_call.1} parent=1 // pred_check
      _
    $region7: #{tpu_custom_call.1} parent=1 // pred_check_branch
      %12 = sbr.rel (0) target = $region9
    $region8: #{tpu_custom_call.1} parent=1 // pred_region
      %14 = vsyncadd [#allocation3], 0
      %s16 = sshll.u32 %s1, 4
      %s17 = int_to_ptr.hbm [resolvable:$true] %s16
      %s18 = sshll.u32 [#allocation2], 4
      %s19 = int_to_ptr.vmem [resolvable:$true] %s18
      %21 = dma.hbm_to_vmem [thread:$0]  %s17, 256, %s19, [#allocation3]
    $region9: #{tpu_custom_call.1} parent=1 // pred_fallthru
      _
    // Predicated region
    $region10: #{tpu_custom_call.1} parent=1 // pred_check
      _
    $region11: #{tpu_custom_call.1} parent=1 // pred_check_branch
      %23 = sbr.rel (0) target = $region13
    $region12: #{tpu_custom_call.1} parent=1 // pred_region
      %25 = dma.done [#allocation3], 256
    $region13: #{tpu_custom_call.1} parent=1 // pred_fallthru
      _
    %s26 = smul.u32 0, 8
    %s27 = scalar_lea.vmem %s0, %s26
    %v28 = vld [vmem:[%s27] sm:$0xff]
    %v29 = vmul.f32 %v28, 0.33647224
    %v30 = vmul.f32 %v29, 1.442695
    %v31 = vpow.pop %v30
    %v32 = vld [vmem:[#allocation2] sm:$0xff]
    %v33 = vld [vmem:[#allocation2 + $0x8] sm:$0xff]
    %35 = vset.pattern.permute.xlu0 0
    %36 = vperm.xlu0 %35, %v31
    %v37 = vpop.permute.xlu0 %36
    %v39 = vmul.f32 %v32, %v37
    %v40 = vmul.f32 %v33, %v37
    %41 = vst [vmem:[#allocation5] sm:$0xff] %v39
    %42 = vst [vmem:[#allocation5 + $0x8] sm:$0xff] %v40
    // Predicated region
    $region14: #{tpu_custom_call.1} parent=1 // pred_check
      _
    $region15: #{tpu_custom_call.1} parent=1 // pred_check_branch
      %44 = sbr.rel (0) target = $region17
    $region16: #{tpu_custom_call.1} parent=1 // pred_region
      %46 = vsyncadd [#allocation4], 0
      %s48 = sshll.u32 [#allocation5], 4
      %s49 = int_to_ptr.vmem [resolvable:$true] %s48
      %s50 = sshll.u32 %s2, 4
      %s51 = int_to_ptr.hbm [resolvable:$true] %s50
      %53 = dma.vmem_to_hbm [thread:$0]  %s49, 256, %s51, [#allocation4]
    $region17: #{tpu_custom_call.1} parent=1 // pred_fallthru
      _
    // Predicated region
    $region18: #{tpu_custom_call.1} parent=1 // pred_check
      _
    $region19: #{tpu_custom_call.1} parent=1 // pred_check_branch
      %55 = sbr.rel (0) target = $region21
    $region20: #{tpu_custom_call.1} parent=1 // pred_region
      %57 = dma.done [#allocation4], 256
    $region21: #{tpu_custom_call.1} parent=1 // pred_fallthru
      _
    %58 = vsyncpa [#allocation3], 1
    %59 = vsyncpa [#allocation4], 1

</llo_original>
